<compile_context>
chip_gen: v7x
topology: tpu7x:2x2x1
jax: 0.10.0
libtpu: 0.0.40
codegen_flags: <defaults>
</compile_context>

<pallas_src>
import functools

import jax
import jax.numpy as jnp
from jax.experimental import pallas as pl
from jax.experimental.pallas import tpu as pltpu


# ----------------------------------------------------------------------------
# Tiling constants.
#  * _TILE_VMEM_BUDGET sizes the double-buffered in+out DMA tiles per grid step
#    (big tiles amortise the ~0.35us per-step overhead).
#  * _VMEM_LIMIT_BYTES raises Mosaic's scoped VMEM limit so those tiles fit,
#    while staying well under v7x's 64 MiB physical VMEM.
# TODO(synk): derive these per generation (v5e/v6e: 128 MiB VMEM, v7x: 64 MiB
# VMEM + 3.2 TB/s HBM) via pltpu.get_tpu_info() instead of fixed constants.
# ----------------------------------------------------------------------------
_TILE_VMEM_BUDGET = 16 << 20
_VMEM_LIMIT_BYTES = 40 << 20
_VREG_F32_BUDGET = 32 * 1024        # ~32 f32 vregs of live intermediates per chunk

_CP_ELEMWISE = pltpu.CompilerParams(
    dimension_semantics=("parallel", "parallel"),
    vmem_limit_bytes=_VMEM_LIMIT_BYTES)
_CP_REDUCE = pltpu.CompilerParams(
    dimension_semantics=("parallel", "arbitrary"),
    vmem_limit_bytes=_VMEM_LIMIT_BYTES)
_CP_FUSED = pltpu.CompilerParams(
    dimension_semantics=("parallel",),
    vmem_limit_bytes=_VMEM_LIMIT_BYTES)


# ----------------------------------------------------------------------------
# Small helpers
# ----------------------------------------------------------------------------
def _round_up(x, m):
    return ((x + m - 1) // m) * m


def _chunk_lanes(live_rows, max_chunk_lanes):
    """Lane width of one in-kernel compute chunk: keeps ~live_rows f32 rows of
    intermediates under ~32 vregs so the pixel/spatial bodies never spill."""
    lanes = _VREG_F32_BUDGET // max(live_rows, 1)
    lanes = max(128, (lanes // 128) * 128)
    return min(lanes, max_chunk_lanes)


def _plan_tiles(hw, c, itemsize, *, copies):
    """Pick the H*W lane tile: returns (thw, num_tiles, padded_hw).

    `copies` tile copies (in + out, each double-buffered) of `c`-row data must
    fit _TILE_VMEM_BUDGET; rows are padded to the sublane packing unit because
    VMEM stores (8,128)-tiled slabs.
    """
    sub = max(1, 32 // itemsize)                   # 8 rows for f32, 16 for bf16
    rows = _round_up(max(c, 1), sub)
    cap = _TILE_VMEM_BUDGET // (copies * rows * itemsize)
    cap = max(128, (cap // 128) * 128)
    kh = pl.cdiv(hw, cap)
    thw = _round_up(pl.cdiv(hw, kh), 128)
    return thw, kh, kh * thw


def _pad_lanes(x3, hw_pad):
    hw = x3.shape[-1]
    if hw_pad == hw:
        return x3
    # TODO(synk): zero-padding costs one extra pass over x in XLA; a masked
    # ragged last block would avoid it when H*W is not a multiple of 128.
    return jnp.pad(x3, ((0, 0), (0, 0), (0, hw_pad - hw)))


def _sigmoid(z):
    # exp and the reciprocal seed both run on the EUP (its own issue slot, off
    # the VALU); one Newton step restores ~f32 accuracy for two cheap VPU ops.
    d = 1.0 + jnp.exp(-z)
    r = pl.reciprocal(d, approx=True)
    return r * (2.0 - d * r)


def _foreach_lane_chunk(thw, chunk, body):
    """Run body(start, width) over [0, thw) in `chunk`-wide lane slices
    (all widths static; ragged tail handled with a second static width)."""
    nfull, rem = divmod(thw, chunk)
    if nfull == 1:
        body(0, chunk)
    elif nfull > 1:
        @pl.loop(0, nfull, unroll=nfull <= 8)
        def _(i):
            body(pl.multiple_of(i * chunk, 128), chunk)
    if rem:
        body(nfull * chunk, rem)


# ----------------------------------------------------------------------------
# Kernels (blocks are (1, C, thw): C on sublanes, H*W tile on lanes)
# ----------------------------------------------------------------------------
def _pixel_kernel(x_ref, w1_ref, b1_ref, w2_ref, b2_ref, o_ref, *, thw, chunk):
    # x: (1, Cin, thw); w1: (Cout, Cin); b1: (Cout, 1); w2: (Cin, Cout); b2: (Cin, 1)
    # The DMA tile is big; compute is chunked over lane slices so the f32
    # intermediates (h, a, x*a) stay within the vreg file instead of spilling.
    w1 = w1_ref[...]
    b1 = b1_ref[...]
    w2 = w2_ref[...]
    b2 = b2_ref[...]

    # TODO(synk): for tiny Cin/Cout a VPU broadcast-multiply + sublane-sum
    # contraction could replace the under-utilised MXU matmuls; the kernel is
    # HBM-bound either way.
    def body(s, width):
        x = x_ref[0, :, pl.ds(s, width)]                        # native dtype
        h = jnp.dot(w1, x, preferred_element_type=jnp.float32) + b1
        a = _sigmoid(jnp.dot(w2, h, preferred_element_type=jnp.float32) + b2)
        o_ref[0, :, pl.ds(s, width)] = (x.astype(jnp.float32) * a).astype(o_ref.dtype)

    _foreach_lane_chunk(thw, chunk, body)


def _spatial_kernel(x_ref, w_ref, b_ref, o_ref, *, thw, chunk):
    # x: (1, C, thw); w: (C, 1); b: (1, 1)
    # VPU multiply + sublane (XLU) reduce instead of a degenerate 1-row matmul.
    w = w_ref[...]
    b = b_ref[...]

    def body(s, width):
        xf = x_ref[0, :, pl.ds(s, width)].astype(jnp.float32)
        a = _sigmoid(jnp.sum(xf * w, axis=0, keepdims=True) + b)
        o_ref[0, :, pl.ds(s, width)] = (xf * a).astype(o_ref.dtype)

    _foreach_lane_chunk(thw, chunk, body)


def _channel_fused_kernel(x_ref, w_ref, b_ref, o_ref, *, hw):
    # Whole (C, H*W) image per grid step: pool + gate + apply in one pass, so x
    # is read from HBM exactly once (2|x| total traffic instead of 3|x|).
    x = x_ref[0]
    pooled = jnp.sum(x, axis=1, keepdims=True, dtype=jnp.float32) * (1.0 / hw)
    g = _sigmoid(
        jnp.dot(w_ref[...], pooled, preferred_element_type=jnp.float32) + b_ref[...])
    o_ref[0] = (x.astype(jnp.float32) * g).astype(o_ref.dtype)


def _channel_pool_kernel(x_ref, s_ref, acc_ref):
    # Pass 1 (large H*W only): accumulate the global sum over H*W lane tiles.
    # x: (1, C, thw); s: (1, C, 1); acc: (C, 1) f32
    k = pl.program_id(1)

    @pl.when(k == 0)
    def _():
        acc_ref[...] = jnp.zeros_like(acc_ref)

    acc_ref[...] += jnp.sum(x_ref[0], axis=1, keepdims=True, dtype=jnp.float32)

    @pl.when(k == pl.num_programs(1) - 1)
    def _():
        s_ref[0] = acc_ref[...]


def _channel_apply_kernel(x_ref, g_ref, o_ref):
    # Pass 2: x * gate, gate (C, 1) broadcast over the H*W lanes.
    # TODO(synk): for C far below the sublane tile, folding a factor of H into
    # the sublane axis would fill vregs for this pure-elementwise pass.
    o_ref[0] = (x_ref[0].astype(jnp.float32) * g_ref[0]).astype(o_ref.dtype)


# ----------------------------------------------------------------------------
# Wrappers (NCHW in, NCHW out; only reshape/pad at the boundary, no transposes)
# ----------------------------------------------------------------------------
def attention_pixel(x_nchw, w1, b1, w2, b2, *, max_chunk_lanes=2048):
    # w1: (Cout, Cin), b1: (Cout,), w2: (Cin, Cout), b2: (Cin,)  (PyTorch conv order)
    n, c, h, w = x_nchw.shape
    hw = h * w
    cout = w1.shape[0]
    x3 = x_nchw.reshape(n, c, hw)
    itemsize = x3.dtype.itemsize

    thw, kh, hw_pad = _plan_tiles(hw, c, itemsize, copies=4)
    chunk = min(_chunk_lanes(3 * c + cout, max_chunk_lanes), thw)
    xp = _pad_lanes(x3, hw_pad)

    out = pl.pallas_call(
        functools.partial(_pixel_kernel, thw=thw, chunk=chunk),
        out_shape=jax.ShapeDtypeStruct((n, c, hw_pad), x3.dtype),
        grid_spec=pltpu.PrefetchScalarGridSpec(
            num_scalar_prefetch=0,
            grid=(n, kh),
            in_specs=[
                pl.BlockSpec((1, c, thw), lambda i, k: (i, 0, k)),
                pl.BlockSpec((cout, c), lambda i, k: (0, 0)),
                pl.BlockSpec((cout, 1), lambda i, k: (0, 0)),
                pl.BlockSpec((c, cout), lambda i, k: (0, 0)),
                pl.BlockSpec((c, 1), lambda i, k: (0, 0)),
            ],
            out_specs=pl.BlockSpec((1, c, thw), lambda i, k: (i, 0, k)),
        ),
        compiler_params=_CP_ELEMWISE,
    )(xp, w1, b1.reshape(cout, 1), w2, b2.reshape(c, 1))
    return out[:, :, :hw].reshape(n, c, h, w)


def attention_spatial(x_nchw, w, b, *, max_chunk_lanes=2048):
    # w: (1, Cin), b: (1,)  (PyTorch conv order)
    n, c, h, wd = x_nchw.shape
    hw = h * wd
    x3 = x_nchw.reshape(n, c, hw)
    itemsize = x3.dtype.itemsize

    thw, kh, hw_pad = _plan_tiles(hw, c, itemsize, copies=4)
    chunk = min(_chunk_lanes(3 * c, max_chunk_lanes), thw)
    xp = _pad_lanes(x3, hw_pad)

    out = pl.pallas_call(
        functools.partial(_spatial_kernel, thw=thw, chunk=chunk),
        out_shape=jax.ShapeDtypeStruct((n, c, hw_pad), x3.dtype),
        grid_spec=pltpu.PrefetchScalarGridSpec(
            num_scalar_prefetch=0,
            grid=(n, kh),
            in_specs=[
                pl.BlockSpec((1, c, thw), lambda i, k: (i, 0, k)),
                pl.BlockSpec((c, 1), lambda i, k: (0, 0)),
                pl.BlockSpec((1, 1), lambda i, k: (0, 0)),
            ],
            out_specs=pl.BlockSpec((1, c, thw), lambda i, k: (i, 0, k)),
        ),
        compiler_params=_CP_ELEMWISE,
    )(xp, w.reshape(c, 1), b.reshape(1, 1))
    return out[:, :, :hw].reshape(n, c, h, wd)


def attention_channel(x_nchw, w, b, *, fuse_limit_bytes=2 << 20):
    # w: (Cin, Cin), b: (Cin,)  (PyTorch conv order)
    n, c, h, wd = x_nchw.shape
    hw = h * wd
    x3 = x_nchw.reshape(n, c, hw)
    itemsize = x3.dtype.itemsize
    sub = max(1, 32 // itemsize)
    block_bytes = _round_up(c, sub) * _round_up(hw, 128) * itemsize

    if block_bytes <= fuse_limit_bytes:
        # One (C, H*W) image fits comfortably in VMEM -> single fused pass
        # (pool + gate + apply), x read from HBM once.
        out = pl.pallas_call(
            functools.partial(_channel_fused_kernel, hw=hw),
            out_shape=jax.ShapeDtypeStruct((n, c, hw), x3.dtype),
            grid_spec=pltpu.PrefetchScalarGridSpec(
                num_scalar_prefetch=0,
                grid=(n,),
                in_specs=[
                    pl.BlockSpec((1, c, hw), lambda i: (i, 0, 0)),
                    pl.BlockSpec((c, c), lambda i: (0, 0)),
                    pl.BlockSpec((c, 1), lambda i: (0, 0)),
                ],
                out_specs=pl.BlockSpec((1, c, hw), lambda i: (i, 0, 0)),
            ),
            compiler_params=_CP_FUSED,
        )(x3, w, b.reshape(c, 1))
        return out.reshape(n, c, h, wd)

    # Large H*W: pass 1 accumulates the pooled sum over lane tiles; the tiny
    # (C,C)@(C,1) matvec + sigmoid is hoisted into plain JAX (keeps a 1-lane
    # degenerate matmul and the (C,C) weight out of every grid step); pass 2
    # applies the gate tile-by-tile.
    # TODO(synk): with N==1 pass 1 has no "parallel" grid axis, so on v7x it
    # runs on one TensorCore; split the H*W sweep across cores if that matters.
    thw, kh, hw_pad = _plan_tiles(hw, c, itemsize, copies=4)
    xp = _pad_lanes(x3, hw_pad)

    sums = pl.pallas_call(
        _channel_pool_kernel,
        out_shape=jax.ShapeDtypeStruct((n, c, 1), jnp.float32),
        grid_spec=pltpu.PrefetchScalarGridSpec(
            num_scalar_prefetch=0,
            grid=(n, kh),
            in_specs=[pl.BlockSpec((1, c, thw), lambda i, k: (i, 0, k))],
            out_specs=pl.BlockSpec((1, c, 1), lambda i, k: (i, 0, 0)),
            scratch_shapes=[pltpu.VMEM((c, 1), jnp.float32)],
        ),
        compiler_params=_CP_REDUCE,
    )(xp)

    # Zero-padded lanes contribute nothing to the sums; divide by the true H*W.
    gate = jax.nn.sigmoid(
        jnp.einsum('oc,nci->noi', w, sums / hw) + b[None, :, None]
    ).astype(jnp.float32)

    out = pl.pallas_call(
        _channel_apply_kernel,
        out_shape=jax.ShapeDtypeStruct((n, c, hw_pad), x3.dtype),
        grid_spec=pltpu.PrefetchScalarGridSpec(
            num_scalar_prefetch=0,
            grid=(n, kh),
            in_specs=[
                pl.BlockSpec((1, c, thw), lambda i, k: (i, 0, k)),
                pl.BlockSpec((1, c, 1), lambda i, k: (i, 0, 0)),
            ],
            out_specs=pl.BlockSpec((1, c, thw), lambda i, k: (i, 0, k)),
        ),
        compiler_params=_CP_ELEMWISE,
    )(xp, gate)
    return out[:, :, :hw].reshape(n, c, h, wd)


# ----------------------------------------------------------------------------
# Pure-JAX references (NCHW semantics of the PyTorch module)
# ----------------------------------------------------------------------------
def ref_pixel(x, w1, b1, w2, b2):
    n, c, h, w = x.shape
    xf = x.reshape(n, c, h * w)
    hm = jnp.einsum('oc,ncm->nom', w1, xf) + b1[None, :, None]
    a = jax.nn.sigmoid(jnp.einsum('co,nom->ncm', w2, hm) + b2[None, :, None])
    return (xf * a).reshape(n, c, h, w)


def ref_channel(x, w, b):
    pooled = jnp.mean(x, axis=(2, 3))                          # (N, C)
    a = jax.nn.sigmoid(jnp.einsum('oc,nc->no', w, pooled) + b[None, :])
    return x * a[:, :, None, None]


def ref_spatial(x, w, b):
    a = jax.nn.sigmoid(jnp.einsum('oc,nchw->nohw', w, x) + b[None, :, None, None])
    return x * a


# ----------------------------------------------------------------------------
if __name__ == "__main__":
    key = jax.random.PRNGKey(0)
    keys = jax.random.split(key, 9)

    N, Cin, H, W = 2, 4, 16, 16
    Cout = 8  # out_channels for the 'pixel' variant

    x = jax.random.normal(keys[0], (N, Cin, H, W), dtype=jnp.float32)

    # 1x1 conv parameters kept in PyTorch (out_channels, in_channels) order.
    w1 = 0.1 * jax.random.normal(keys[1], (Cout, Cin), dtype=jnp.float32)
    b1 = 0.1 * jax.random.normal(keys[2], (Cout,), dtype=jnp.float32)
    w2 = 0.1 * jax.random.normal(keys[3], (Cin, Cout), dtype=jnp.float32)
    b2 = 0.1 * jax.random.normal(keys[4], (Cin,), dtype=jnp.float32)

    wc = 0.1 * jax.random.normal(keys[5], (Cin, Cin), dtype=jnp.float32)
    bc = 0.1 * jax.random.normal(keys[6], (Cin,), dtype=jnp.float32)

    ws = 0.1 * jax.random.normal(keys[7], (1, Cin), dtype=jnp.float32)
    bs = 0.1 * jax.random.normal(keys[8], (1,), dtype=jnp.float32)

    def check(got, want, name):
        assert jnp.allclose(got, want, atol=1e-4, rtol=1e-4), name

    out = jax.block_until_ready(attention_pixel(x, w1, b1, w2, b2))
    check(out, ref_pixel(x, w1, b1, w2, b2), "pixel")

    out = jax.block_until_ready(attention_channel(x, wc, bc))          # fused path
    check(out, ref_channel(x, wc, bc), "channel/fused")

    out = jax.block_until_ready(
        attention_channel(x, wc, bc, fuse_limit_bytes=0))               # two-pass path
    check(out, ref_channel(x, wc, bc), "channel/two-pass")

    out = jax.block_until_ready(attention_spatial(x, ws, bs))
    check(out, ref_spatial(x, ws, bs), "spatial")

    # Odd H*W (not a multiple of 128) + forced small chunk: exercises the lane
    # padding path and the in-kernel chunk loop.
    H2 = W2 = 20
    x2 = jax.random.normal(keys[0], (N, Cin, H2, W2), dtype=jnp.float32)

    out = jax.block_until_ready(
        attention_pixel(x2, w1, b1, w2, b2, max_chunk_lanes=128))
    check(out, ref_pixel(x2, w1, b1, w2, b2), "pixel/ragged")

    out = jax.block_until_ready(attention_spatial(x2, ws, bs, max_chunk_lanes=128))
    check(out, ref_spatial(x2, ws, bs), "spatial/ragged")

    out = jax.block_until_ready(attention_channel(x2, wc, bc))
    check(out, ref_channel(x2, wc, bc), "channel/fused-ragged")

    out = jax.block_until_ready(attention_channel(x2, wc, bc, fuse_limit_bytes=0))
    check(out, ref_channel(x2, wc, bc), "channel/two-pass-ragged")

    print("KERNEL_OK")
</pallas_src>

<mosaic_0001>
module attributes {stable_mosaic.version = 11 : i64} {
  func.func @_pixel_kernel(%arg0: i32, %arg1: i32, %arg2: memref<1x4x256xf32, #tpu.memory_space<vmem>>, %arg3: memref<8x4xf32, #tpu.memory_space<vmem>>, %arg4: memref<8x1xf32, #tpu.memory_space<vmem>>, %arg5: memref<4x8xf32, #tpu.memory_space<vmem>>, %arg6: memref<4x1xf32, #tpu.memory_space<vmem>>, %arg7: memref<1x4x256xf32, #tpu.memory_space<vmem>>) attributes {dimension_semantics = [#tpu.dimension_semantics<parallel>, #tpu.dimension_semantics<parallel>], iteration_bounds = array<i64: 2, 1>, scalar_prefetch = 0 : i64, scratch_operands = 0 : i64, tpu.core_type = #tpu.core_type<tc>, window_params = [{transform_indices = @transform_0, window_bounds = array<i64: 1, 4, 256>}, {pipeline_mode = #tpu.pipeline_mode<synchronous>, transform_indices = @transform_1, window_bounds = array<i64: 8, 4>}, {pipeline_mode = #tpu.pipeline_mode<synchronous>, transform_indices = @transform_2, window_bounds = array<i64: 8, 1>}, {pipeline_mode = #tpu.pipeline_mode<synchronous>, transform_indices = @transform_3, window_bounds = array<i64: 4, 8>}, {pipeline_mode = #tpu.pipeline_mode<synchronous>, transform_indices = @transform_4, window_bounds = array<i64: 4, 1>}, {transform_indices = @transform_5, window_bounds = array<i64: 1, 4, 256>}]} {
    %c0 = arith.constant 0 : index
    %c0_0 = arith.constant 0 : index
    %0 = vector.load %arg3[%c0, %c0_0] : memref<8x4xf32, #tpu.memory_space<vmem>>, vector<8x4xf32>
    %c0_1 = arith.constant 0 : index
    %c0_2 = arith.constant 0 : index
    %1 = vector.load %arg4[%c0_1, %c0_2] : memref<8x1xf32, #tpu.memory_space<vmem>>, vector<8x1xf32>
    %c0_3 = arith.constant 0 : index
    %c0_4 = arith.constant 0 : index
    %2 = vector.load %arg5[%c0_3, %c0_4] : memref<4x8xf32, #tpu.memory_space<vmem>>, vector<4x8xf32>
    %c0_5 = arith.constant 0 : index
    %c0_6 = arith.constant 0 : index
    %3 = vector.load %arg6[%c0_5, %c0_6] : memref<4x1xf32, #tpu.memory_space<vmem>>, vector<4x1xf32>
    %c0_7 = arith.constant 0 : index
    %c0_8 = arith.constant 0 : index
    %c0_9 = arith.constant 0 : index
    %4 = vector.load %arg2[%c0_7, %c0_8, %c0_9] : memref<1x4x256xf32, #tpu.memory_space<vmem>>, vector<1x4x256xf32>
    %5 = vector.shape_cast %4 : vector<1x4x256xf32> to vector<4x256xf32>
    %cst = arith.constant dense<0.000000e+00> : vector<8x256xf32>
    %6 = tpu.matmul %0, %5, %cst {dimension_numbers = #tpu.dot_dimension_numbers<[1], [0], [0], [1], [0, 0, 1, 1], [], []>} : vector<8x4xf32>, vector<4x256xf32>, vector<8x256xf32> -> vector<8x256xf32>
    %7 = vector.broadcast %1 : vector<8x1xf32> to vector<8x256xf32>
    %8 = arith.addf %6, %7 : vector<8x256xf32>
    %cst_10 = arith.constant dense<0.000000e+00> : vector<4x256xf32>
    %9 = tpu.matmul %2, %8, %cst_10 {dimension_numbers = #tpu.dot_dimension_numbers<[1], [0], [0], [1], [0, 0, 1, 1], [], []>} : vector<4x8xf32>, vector<8x256xf32>, vector<4x256xf32> -> vector<4x256xf32>
    %10 = vector.broadcast %3 : vector<4x1xf32> to vector<4x256xf32>
    %11 = arith.addf %9, %10 : vector<4x256xf32>
    %cst_11 = arith.constant 0.000000e+00 : f32
    %12 = vector.broadcast %cst_11 : f32 to vector<4x256xf32>
    %13 = arith.subf %12, %11 : vector<4x256xf32>
    %14 = math.exp %13 : vector<4x256xf32>
    %cst_12 = arith.constant 1.000000e+00 : f32
    %15 = vector.broadcast %cst_12 : f32 to vector<4x256xf32>
    %16 = arith.addf %15, %14 : vector<4x256xf32>
    %17 = tpu.reciprocal %16 {approx = true} : vector<4x256xf32> -> vector<4x256xf32>
    %18 = arith.mulf %16, %17 : vector<4x256xf32>
    %cst_13 = arith.constant 2.000000e+00 : f32
    %19 = vector.broadcast %cst_13 : f32 to vector<4x256xf32>
    %20 = arith.subf %19, %18 : vector<4x256xf32>
    %21 = arith.mulf %17, %20 : vector<4x256xf32>
    %22 = arith.mulf %5, %21 : vector<4x256xf32>
    %c0_14 = arith.constant 0 : index
    %c0_15 = arith.constant 0 : index
    %c0_16 = arith.constant 0 : index
    %23 = vector.load %arg7[%c0_14, %c0_15, %c0_16] : memref<1x4x256xf32, #tpu.memory_space<vmem>>, vector<1x4x256xf32>
    %24 = vector.shape_cast %23 : vector<1x4x256xf32> to vector<4x256xf32>
    %25 = vector.shape_cast %22 : vector<4x256xf32> to vector<1x4x256xf32>
    tpu.vector_store %arg7[%c0_14, %c0_15, %c0_16], %25 {strides = array<i32>} : memref<1x4x256xf32, #tpu.memory_space<vmem>>, vector<1x4x256xf32>,
    return
  }
  func.func @transform_0(%arg0: i32, %arg1: i32) -> (i32, i32, i32) {
    %c0_i32 = arith.constant 0 : i32
    %c0_i32_0 = arith.constant 0 : i32
    return %arg0, %c0_i32, %arg1 : i32, i32, i32
  }
  func.func @transform_1(%arg0: i32, %arg1: i32) -> (i32, i32) {
    %c0_i32 = arith.constant 0 : i32
    %c0_i32_0 = arith.constant 0 : i32
    %c0_i32_1 = arith.constant 0 : i32
    return %c0_i32, %c0_i32_0 : i32, i32
  }
  func.func @transform_2(%arg0: i32, %arg1: i32) -> (i32, i32) {
    %c0_i32 = arith.constant 0 : i32
    %c0_i32_0 = arith.constant 0 : i32
    %c0_i32_1 = arith.constant 0 : i32
    return %c0_i32, %c0_i32_0 : i32, i32
  }
  func.func @transform_3(%arg0: i32, %arg1: i32) -> (i32, i32) {
    %c0_i32 = arith.constant 0 : i32
    %c0_i32_0 = arith.constant 0 : i32
    %c0_i32_1 = arith.constant 0 : i32
    return %c0_i32, %c0_i32_0 : i32, i32
  }
  func.func @transform_4(%arg0: i32, %arg1: i32) -> (i32, i32) {
    %c0_i32 = arith.constant 0 : i32
    %c0_i32_0 = arith.constant 0 : i32
    %c0_i32_1 = arith.constant 0 : i32
    return %c0_i32, %c0_i32_0 : i32, i32
  }
  func.func @transform_5(%arg0: i32, %arg1: i32) -> (i32, i32, i32) {
    %c0_i32 = arith.constant 0 : i32
    %c0_i32_0 = arith.constant 0 : i32
    return %arg0, %c0_i32, %arg1 : i32, i32, i32
  }
}

</mosaic_0001>

<llo_original>
// kernel: tpu_custom_call.1
$region0: #{tpu_custom_call.1}
  #allocation0 [shape = 'u32[]', space=smem, size = 0x4, offset = 0x4, fixed_abs, tag = 'smem constant byte address 0x4 - core index']
  #allocation1 [shape = 'u32[144,128]{1,0:T(1,128)}', space=vmem, size = 0x12000, scoped, tag = 'internal scratch']
  %s0 = inlined_call_operand.vmem [shape: f32[2,4,256], index: 0, kind: input, shape index: {}]
  %s1 = inlined_call_operand.vmem [shape: f32[8,4], index: 1, kind: input, shape index: {}]
  %s2 = inlined_call_operand.vmem [shape: f32[8,1], index: 2, kind: input, shape index: {}]
  %s3 = inlined_call_operand.vmem [shape: f32[4,8], index: 3, kind: input, shape index: {}]
  %s4 = inlined_call_operand.vmem [shape: f32[4,1], index: 4, kind: input, shape index: {}]
  %s5 = inlined_call_operand.hbm [shape: f32[2,4,256], index: 5, kind: output, shape index: {}]
  %s6 = sld [smem:[#allocation0]]
  $region53: #{tpu_custom_call.1} parent=0
    _
  %s8 = ssub.s32 1, %s6
  %s9 = scalar_select 0, %s8, %s6
  $region1: #{tpu_custom_call.1} parent=0
    #allocation2 [shape = 'u8[8192]{0}', space=vmem, size = 0x2000, scoped, tag = 'output window, operand 0']
    #allocation3 [shape = 's32[2]{0}', space=sflag, size = 0x8, scoped, tag = 'scoped memory for tpu_custom_call.1']
    %10 = vsyncpa [#allocation3], 0
    %s11 = scalar_lea.sflag [#allocation3], 1
    %12 = vsyncpa %s11, 0
    loop: start=0, step=1, limit=4
    $region2: #{tpu_custom_call.1} parent=1 // loop_pre_header
      _
    $region3: #{tpu_custom_call.1} parent=1 // loop_header
      %s14 = sphi 0, %s18
      %p15 = scmp.ge.s32.totalorder %s14, 4
      %s21 = sphi 0, %s33
      %s22 = sphi 0, %s29
      %s23 = sphi 0, %s21
      %s24 = sphi 0, %s22
      %s25 = sphi 0, %s23
      %s26 = sphi 0, %s24
      %s38 = sphi 0, %s40
      %s41 = sphi 0, %s38
      %s42 = sphi 0, %s41
      %s58 = sphi 0, %s42
      %s62 = sphi 0, %s62
      %s64 = sphi 0, %s62
      %s65 = sphi 0, %s64
      %s79 = sphi 0, %s65
      %s83 = sphi 0, %s83
      %s85 = sphi 0, %s83
      %s86 = sphi 0, %s85
      %s100 = sphi 0, %s86
      %s104 = sphi 0, %s104
      %s106 = sphi 0, %s104
      %s107 = sphi 0, %s106
      %s121 = sphi 0, %s107
      %s125 = sphi 0, %s125
      %s127 = sphi 0, %s125
      %s128 = sphi 0, %s127
      %s142 = sphi 0, %s128
      %s150 = sphi 0, %s152
      %s153 = sphi 0, %s150
      %s154 = sphi 0, %s153
      %s170 = sphi 0, %s154
    $region4: #{tpu_custom_call.1} parent=1 // loop_header_branch
      %17 = sbr.rel (%p15) target = $region8
    $region5: #{tpu_custom_call.1} parent=1 // loop_body
      %s19 = ssub.s32 %s14, 1
      %s20 = ssub.s32 %s14, 2
      %s27 = sadd.s32 1, %s22
      %p28 = scmp.ge.s32.totalorder %s27, 1
      %s29 = scalar_select %p28, 0, %s27
      %s30 = sadd.s32 1, %s21
      %s31 = scalar_select %p28, %s30, %s21
      %p32 = scmp.ge.s32.totalorder %s31, 2
      %s33 = scalar_select %p32, 0, %s31
      %s34 = ssub.s32 %s21, %s33
      %s35 = ssub.s32 %s22, %s29
      %s36 = sor.u32 %s34, %s35
      %p37 = scmp.eq.s32.totalorder %s36, 0
      %s39 = sadd.s32 %s38, 1
      %s40 = scalar_select %p37, %s38, %s39
      %p43 = pneg %p37
      %p44 = scmp.eq.s32.totalorder %s14, 1
      %p45 = por %p43, %p44
      %p46 = scmp.ne.s32.totalorder %s38, %s41
      %p47 = scmp.eq.s32.totalorder %s14, 0
      %p48 = por %p46, %p47
      %p49 = scmp.ne.s32.totalorder %s38, %s41
      %p50 = scmp.eq.s32.totalorder %s19, 1
      %p51 = por %p49, %p50
      %p52 = scmp.ne.s32.totalorder %s41, %s42
      %p53 = scmp.eq.s32.totalorder %s19, 0
      %p54 = por %p52, %p53
      %p55 = scmp.ne.s32.totalorder %s41, %s42
      %p56 = scmp.eq.s32.totalorder %s20, 1
      %p57 = por %p55, %p56
      %p59 = scmp.ne.s32.totalorder %s42, %s58
      %p60 = scmp.eq.s32.totalorder %s20, 0
      %p61 = por %p59, %p60
      %s63 = sadd.s32 %s62, 1
      %p66 = scmp.eq.s32.totalorder %s14, 1
      %p67 = scmp.ne.s32.totalorder %s62, %s64
      %p68 = scmp.eq.s32.totalorder %s14, 0
      %p69 = por %p67, %p68
      %p70 = scmp.ne.s32.totalorder %s62, %s64
      %p71 = scmp.eq.s32.totalorder %s19, 1
      %p72 = por %p70, %p71
      %p73 = scmp.ne.s32.totalorder %s64, %s65
      %p74 = scmp.eq.s32.totalorder %s19, 0
      %p75 = por %p73, %p74
      %p76 = scmp.ne.s32.totalorder %s64, %s65
      %p77 = scmp.eq.s32.totalorder %s20, 1
      %p78 = por %p76, %p77
      %p80 = scmp.ne.s32.totalorder %s65, %s79
      %p81 = scmp.eq.s32.totalorder %s20, 0
      %p82 = por %p80, %p81
      %s84 = sadd.s32 %s83, 1
      %p87 = scmp.eq.s32.totalorder %s14, 1
      %p88 = scmp.ne.s32.totalorder %s83, %s85
      %p89 = scmp.eq.s32.totalorder %s14, 0
      %p90 = por %p88, %p89
      %p91 = scmp.ne.s32.totalorder %s83, %s85
      %p92 = scmp.eq.s32.totalorder %s19, 1
      %p93 = por %p91, %p92
      %p94 = scmp.ne.s32.totalorder %s85, %s86
      %p95 = scmp.eq.s32.totalorder %s19, 0
      %p96 = por %p94, %p95
      %p97 = scmp.ne.s32.totalorder %s85, %s86
      %p98 = scmp.eq.s32.totalorder %s20, 1
      %p99 = por %p97, %p98
      %p101 = scmp.ne.s32.totalorder %s86, %s100
      %p102 = scmp.eq.s32.totalorder %s20, 0
      %p103 = por %p101, %p102
      %s105 = sadd.s32 %s104, 1
      %p108 = scmp.eq.s32.totalorder %s14, 1
      %p109 = scmp.ne.s32.totalorder %s104, %s106
      %p110 = scmp.eq.s32.totalorder %s14, 0
      %p111 = por %p109, %p110
      %p112 = scmp.ne.s32.totalorder %s104, %s106
      %p113 = scmp.eq.s32.totalorder %s19, 1
      %p114 = por %p112, %p113
      %p115 = scmp.ne.s32.totalorder %s106, %s107
      %p116 = scmp.eq.s32.totalorder %s19, 0
      %p117 = por %p115, %p116
      %p118 = scmp.ne.s32.totalorder %s106, %s107
      %p119 = scmp.eq.s32.totalorder %s20, 1
      %p120 = por %p118, %p119
      %p122 = scmp.ne.s32.totalorder %s107, %s121
      %p123 = scmp.eq.s32.totalorder %s20, 0
      %p124 = por %p122, %p123
      %s126 = sadd.s32 %s125, 1
      %p129 = scmp.eq.s32.totalorder %s14, 1
      %p130 = scmp.ne.s32.totalorder %s125, %s127
      %p131 = scmp.eq.s32.totalorder %s14, 0
      %p132 = por %p130, %p131
      %p133 = scmp.ne.s32.totalorder %s125, %s127
      %p134 = scmp.eq.s32.totalorder %s19, 1
      %p135 = por %p133, %p134
      %p136 = scmp.ne.s32.totalorder %s127, %s128
      %p137 = scmp.eq.s32.totalorder %s19, 0
      %p138 = por %p136, %p137
      %p139 = scmp.ne.s32.totalorder %s127, %s128
      %p140 = scmp.eq.s32.totalorder %s20, 1
      %p141 = por %p139, %p140
      %p143 = scmp.ne.s32.totalorder %s128, %s142
      %p144 = scmp.eq.s32.totalorder %s20, 0
      %p145 = por %p143, %p144
      %s146 = ssub.s32 %s21, %s33
      %s147 = ssub.s32 %s22, %s29
      %s148 = sor.u32 %s146, %s147
      %p149 = scmp.eq.s32.totalorder %s148, 0
      %s151 = sadd.s32 %s150, 1
      %s152 = scalar_select %p149, %s150, %s151
      %p155 = pneg %p149
      %p156 = scmp.eq.s32.totalorder %s14, 1
      %p157 = por %p155, %p156
      %p158 = scmp.ne.s32.totalorder %s150, %s153
      %p159 = scmp.eq.s32.totalorder %s14, 0
      %p160 = por %p158, %p159
      %p161 = scmp.ne.s32.totalorder %s150, %s153
      %p162 = scmp.eq.s32.totalorder %s19, 1
      %p163 = por %p161, %p162
      %p164 = scmp.ne.s32.totalorder %s153, %s154
      %p165 = scmp.eq.s32.totalorder %s19, 0
      %p166 = por %p164, %p165
      %p167 = scmp.ne.s32.totalorder %s153, %s154
      %p168 = scmp.eq.s32.totalorder %s20, 1
      %p169 = por %p167, %p168
      %p171 = scmp.ne.s32.totalorder %s154, %s170
      %p172 = scmp.eq.s32.totalorder %s20, 0
      %p173 = por %p171, %p172
      %p174 = scmp.le.s32.totalorder 1, %s14
      %p175 = scmp.lt.s32.totalorder %s14, 3
      %p176 = pnand %p174, %p175
      %p177 = pneg %p176
      // Predicated region
      $region9: #{tpu_custom_call.1} parent=5 // pred_check
        _
      $region10: #{tpu_custom_call.1} parent=5 // pred_check_branch
        %179 = sbr.rel (%p176) target = $region12
      $region11: #{tpu_custom_call.1} parent=5 // pred_region
        %s180 = ssub.s32 %s14, 1
        // Predicated region
        $region13: #{tpu_custom_call.1} parent=11 // pred_check
          %p181 = pneg %p75
        $region14: #{tpu_custom_call.1} parent=11 // pred_check_branch
          %183 = sbr.rel (%p181) target = $region16
        $region15: #{tpu_custom_call.1} parent=11 // pred_region
          _
        $region16: #{tpu_custom_call.1} parent=11 // pred_fallthru
          _
        // Predicated region
        $region17: #{tpu_custom_call.1} parent=11 // pred_check
          %p184 = pneg %p96
        $region18: #{tpu_custom_call.1} parent=11 // pred_check_branch
          %186 = sbr.rel (%p184) target = $region20
        $region19: #{tpu_custom_call.1} parent=11 // pred_region
          _
        $region20: #{tpu_custom_call.1} parent=11 // pred_fallthru
          _
        // Predicated region
        $region21: #{tpu_custom_call.1} parent=11 // pred_check
          %p187 = pneg %p117
        $region22: #{tpu_custom_call.1} parent=11 // pred_check_branch
          %189 = sbr.rel (%p187) target = $region24
        $region23: #{tpu_custom_call.1} parent=11 // pred_region
          _
        $region24: #{tpu_custom_call.1} parent=11 // pred_fallthru
          _
        // Predicated region
        $region25: #{tpu_custom_call.1} parent=11 // pred_check
          %p190 = pneg %p138
        $region26: #{tpu_custom_call.1} parent=11 // pred_check_branch
          %192 = sbr.rel (%p190) target = $region28
        $region27: #{tpu_custom_call.1} parent=11 // pred_region
          _
        $region28: #{tpu_custom_call.1} parent=11 // pred_fallthru
          _
      $region12: #{tpu_custom_call.1} parent=5 // pred_fallthru
        _
      %p193 = scmp.lt.s32.totalorder %s14, 2
      // Predicated region
      $region29: #{tpu_custom_call.1} parent=5 // pred_check
        %p194 = pneg %p193
      $region30: #{tpu_custom_call.1} parent=5 // pred_check_branch
        %196 = sbr.rel (%p194) target = $region32
      $region31: #{tpu_custom_call.1} parent=5 // pred_region
        // Predicated region
        $region33: #{tpu_custom_call.1} parent=31 // pred_check
          %p197 = pneg %p48
        $region34: #{tpu_custom_call.1} parent=31 // pred_check_branch
          %199 = sbr.rel (%p197) target = $region36
        $region35: #{tpu_custom_call.1} parent=31 // pred_region
          %s200 = smul.u32 2, %s22
          %p201 = scmp.lt.s32.totalorder %s21, 1
          %s202 = scalar_select %p201, %s21, 1
          %p203 = scmp.lt.s32.totalorder %s200, 1
          %s204 = scalar_select %p203, %s200, 1
          %s205 = smul.addr %s202, 2
          %s206 = sadd.s32 %s204, %s205
          %s207 = smul.addr %s206, 4
          %s208 = scalar_lea.vmem %s0, %s207
          %s209 = smul.u32 2, %s22
        $region36: #{tpu_custom_call.1} parent=31 // pred_fallthru
          _
      $region32: #{tpu_custom_call.1} parent=5 // pred_fallthru
        _
      %p210 = scmp.le.s32.totalorder 1, %s14
      %p211 = scmp.lt.s32.totalorder %s14, 3
      %p212 = pnand %p210, %p211
      %p213 = pneg %p212
      // Predicated region
      $region37: #{tpu_custom_call.1} parent=5 // pred_check
        _
      $region38: #{tpu_custom_call.1} parent=5 // pred_check_branch
        %215 = sbr.rel (%p212) target = $region40
      $region39: #{tpu_custom_call.1} parent=5 // pred_region
        %s216 = ssub.s32 %s14, 1
        %s217 = smul.u32 2, %s24
        %p218 = scmp.lt.s32.totalorder %s23, 1
        %s219 = scalar_select %p218, %s23, 1
        %p220 = scmp.lt.s32.totalorder %s217, 1
        %s221 = scalar_select %p220, %s217, 1
        %s222 = smul.addr %s219, 2
        %s223 = sadd.s32 %s221, %s222
        %s224 = smul.addr %s223, 4
        %s225 = scalar_lea.vmem %s0, %s224
        %p226 = pneg %p54
        %p227 = pneg %p51
        %p228 = pneg %p75
        %p229 = pneg %p72
        %p230 = pneg %p96
        %p231 = pneg %p93
        %p232 = pneg %p117
        %p233 = pneg %p114
        %p234 = pneg %p138
        %p235 = pneg %p135
        %p236 = pneg %p166
        %p237 = pneg %p163
        %s238 = sand.u32 %s153, 1
        %s239 = scalar_lea.sflag [#allocation3], %s238
        %s240 = sand.u32 %s153, 1
        %s241 = smul.addr %s240, 8
        %s242 = scalar_lea.vmem [#allocation2], %s241
        %s243 = smul.u32 2, %s24
        %p244 = scmp.lt.s32.totalorder %s23, 1
        %s245 = scalar_select %p244, %s23, 1
        %p246 = scmp.lt.s32.totalorder %s243, 1
        %s247 = scalar_select %p246, %s243, 1
        %s248 = smul.addr %s245, 2
        %s249 = sadd.s32 %s247, %s248
        %s250 = smul.addr %s249, 4
        %s251 = scalar_lea.vmem %s0, %s250
        %s252 = smul.u32 2, %s24
        %s253 = smul.u32 2, %s24
        %v254 = vld [vmem:[%s1] sm:$0xff]
        %v255 = vld [vmem:[%s2] sm:$0xff]
        %v256 = vld [vmem:[%s3] sm:$0xf]
        %v257 = vld [vmem:[%s4] sm:$0xf]
        %v258 = vld [vmem:[%s251] sm:$0xff]
        %260 = vset.pattern.permute.xlu0 0
        %261 = vperm.xlu0 %260, %v255
        %v262 = vpop.permute.xlu0 %261
        %v265 = vcombine.high %v258, %v258
        %vm266 = vcmask 31744
        %v268 = vsel %vm266, %v254, 0
        %vm270 = vcmask 1043456
        %v271 = vsel %vm270, %v258, 0
        %v273 = vsel %vm270, %v265, 0
        %275 = vmatprep.subr.mxu0 %v273
        %276 = vmatpush1.msra.mxu0 %v271
        %277 = vmatprep.subr.mxu0 0.0
        %278 = vmatpush1.msra.mxu0 0.0
        %279 = vmatprep.subr.mxu0 0.0
        %280 = vmatpush1.msra.mxu0 0.0
        %281 = vmatprep.subr.mxu0 0.0
        %282 = vmatpush1.msra.mxu0 0.0
        %283 = vmatprep.subr.mxu0 0.0
        %284 = vmatpush1.msra.mxu0 0.0
        %285 = vmatprep.subr.mxu0 0.0
        %286 = vmatpush1.msra.mxu0 0.0
        %287 = vmatprep.subr.mxu0 0.0
        %288 = vmatpush1.msra.mxu0 0.0
        %289 = vmatprep.subr.mxu0 0.0
        %290 = vmatpush1.msra.mxu0 0.0
        %291 = vmatprep.subr.mxu0 0.0
        %292 = vmatpush1.msra.mxu0 0.0
        %293 = vmatprep.subr.mxu0 0.0
        %294 = vmatpush1.msra.mxu0 0.0
        %295 = vmatprep.subr.mxu0 0.0
        %296 = vmatpush1.msra.mxu0 0.0
        %297 = vmatprep.subr.mxu0 0.0
        %298 = vmatpush1.msra.mxu0 0.0
        %299 = vmatprep.subr.mxu0 0.0
        %300 = vmatpush1.msra.mxu0 0.0
        %301 = vmatprep.subr.mxu0 0.0
        %302 = vmatpush1.msra.mxu0 0.0
        %303 = vmatprep.subr.mxu0 0.0
        %304 = vmatpush1.msra.mxu0 0.0
        %305 = vmatprep.subr.mxu0 0.0
        %306 = vmatpush1.msra.mxu0 0.0
        %307 = vmatprep.subr.mxu0 0.0
        %308 = vmatpush1.msra.mxu0 0.0
        %309 = vmatprep.subr.mxu0 0.0
        %310 = vmatpush1.msra.mxu0 0.0
        %311 = vmatprep.subr.mxu0 0.0
        %312 = vmatpush1.msra.mxu0 0.0
        %313 = vmatprep.subr.mxu0 0.0
        %314 = vmatpush1.msra.mxu0 0.0
        %315 = vmatprep.subr.mxu0 0.0
        %316 = vmatpush1.msra.mxu0 0.0
        %317 = vmatprep.subr.mxu0 0.0
        %318 = vmatpush1.msra.mxu0 0.0
        %319 = vmatprep.subr.mxu0 0.0
        %320 = vmatpush1.msra.mxu0 0.0
        %321 = vmatprep.subr.mxu0 0.0
        %322 = vmatpush1.msra.mxu0 0.0
        %323 = vmatprep.subr.mxu0 0.0
        %324 = vmatpush1.msra.mxu0 0.0
        %325 = vmatprep.subr.mxu0 0.0
        %326 = vmatpush1.msra.mxu0 0.0
        %327 = vmatprep.subr.mxu0 0.0
        %328 = vmatpush1.msra.mxu0 0.0
        %329 = vmatprep.subr.mxu0 0.0
        %330 = vmatpush1.msra.mxu0 0.0
        %331 = vmatprep.subr.mxu0 0.0
        %332 = vmatpush1.msra.mxu0 0.0
        %333 = vmatprep.subr.mxu0 0.0
        %334 = vmatpush1.msra.mxu0 0.0
        %335 = vmatprep.subr.mxu0 0.0
        %336 = vmatpush1.msra.mxu0 0.0
        %337 = vmatprep.subr.mxu0 0.0
        %338 = vmatpush1.msra.mxu0 0.0
        %339 = vmatprep.mubr.f32.mxu0 0.0
        %340 = vmatmul.mubr.f32.gmra.mrb[0].mxu0 %v268
        %v341 = vpop.f32.mrb[0].mxu0
        %v342 = vadd.f32 %v262, %v341
        %v343 = vpop.f32.mrb[0].mxu0
        %v344 = vadd.f32 %v262, %v343
        %345 = vdwg.mxu0
        %347 = vset.pattern.permute.xlu0 0
        %348 = vperm.xlu0 %347, %v257
        %v349 = vpop.permute.xlu0 %348
        %vm351 = vcmask 64512
        %v353 = vsel %vm351, %v256, 0
        %355 = vmatprep.subr.mxu0 %v344
        %356 = vmatpush1.msra.mxu0 %v342
        %357 = vmatprep.subr.mxu0 0.0
        %358 = vmatpush1.msra.mxu0 0.0
        %359 = vmatprep.subr.mxu0 0.0
        %360 = vmatpush1.msra.mxu0 0.0
        %361 = vmatprep.subr.mxu0 0.0
        %362 = vmatpush1.msra.mxu0 0.0
        %363 = vmatprep.subr.mxu0 0.0
        %364 = vmatpush1.msra.mxu0 0.0
        %365 = vmatprep.subr.mxu0 0.0
        %366 = vmatpush1.msra.mxu0 0.0
        %367 = vmatprep.subr.mxu0 0.0
        %368 = vmatpush1.msra.mxu0 0.0
        %369 = vmatprep.subr.mxu0 0.0
        %370 = vmatpush1.msra.mxu0 0.0
        %371 = vmatprep.subr.mxu0 0.0
        %372 = vmatpush1.msra.mxu0 0.0
        %373 = vmatprep.subr.mxu0 0.0
        %374 = vmatpush1.msra.mxu0 0.0
        %375 = vmatprep.subr.mxu0 0.0
        %376 = vmatpush1.msra.mxu0 0.0
        %377 = vmatprep.subr.mxu0 0.0
        %378 = vmatpush1.msra.mxu0 0.0
        %379 = vmatprep.subr.mxu0 0.0
        %380 = vmatpush1.msra.mxu0 0.0
        %381 = vmatprep.subr.mxu0 0.0
        %382 = vmatpush1.msra.mxu0 0.0
        %383 = vmatprep.subr.mxu0 0.0
        %384 = vmatpush1.msra.mxu0 0.0
        %385 = vmatprep.subr.mxu0 0.0
        %386 = vmatpush1.msra.mxu0 0.0
        %387 = vmatprep.subr.mxu0 0.0
        %388 = vmatpush1.msra.mxu0 0.0
        %389 = vmatprep.subr.mxu0 0.0
        %390 = vmatpush1.msra.mxu0 0.0
        %391 = vmatprep.subr.mxu0 0.0
        %392 = vmatpush1.msra.mxu0 0.0
        %393 = vmatprep.subr.mxu0 0.0
        %394 = vmatpush1.msra.mxu0 0.0
        %395 = vmatprep.subr.mxu0 0.0
        %396 = vmatpush1.msra.mxu0 0.0
        %397 = vmatprep.subr.mxu0 0.0
        %398 = vmatpush1.msra.mxu0 0.0
        %399 = vmatprep.subr.mxu0 0.0
        %400 = vmatpush1.msra.mxu0 0.0
        %401 = vmatprep.subr.mxu0 0.0
        %402 = vmatpush1.msra.mxu0 0.0
        %403 = vmatprep.subr.mxu0 0.0
        %404 = vmatpush1.msra.mxu0 0.0
        %405 = vmatprep.subr.mxu0 0.0
        %406 = vmatpush1.msra.mxu0 0.0
        %407 = vmatprep.subr.mxu0 0.0
        %408 = vmatpush1.msra.mxu0 0.0
        %409 = vmatprep.subr.mxu0 0.0
        %410 = vmatpush1.msra.mxu0 0.0
        %411 = vmatprep.subr.mxu0 0.0
        %412 = vmatpush1.msra.mxu0 0.0
        %413 = vmatprep.subr.mxu0 0.0
        %414 = vmatpush1.msra.mxu0 0.0
        %415 = vmatprep.subr.mxu0 0.0
        %416 = vmatpush1.msra.mxu0 0.0
        %417 = vmatprep.subr.mxu0 0.0
        %418 = vmatpush1.msra.mxu0 0.0
        %419 = vmatprep.mubr.f32.mxu0 0.0
        %420 = vmatmul.mubr.f32.gmra.mrb[0].mxu0 %v353
        %v421 = vpop.f32.mrb[0].mxu0
        %v422 = vadd.f32 %v349, %v421
        %v423 = vpop.f32.mrb[0].mxu0
        %v424 = vadd.f32 %v349, %v423
        %425 = vdwg.mxu0
        %v426 = vsub.f32 0.0, %v422
        %v427 = vsub.f32 0.0, %v424
        %v428 = vmul.f32 %v426, 1.442695
        %v429 = vpow.pop %v428
        %v430 = vmul.f32 %v427, 1.442695
        %v431 = vpow.pop %v430
        %v432 = vadd.f32 %v429, 1.0
        %v433 = vadd.f32 %v431, 1.0
        %v434 = vrcp.pop %v432
        %v435 = vrcp.pop %v433
        %v436 = vmul.f32 %v432, %v434
        %v437 = vmul.f32 %v433, %v435
        %v438 = vsub.f32 2.0, %v436
        %v439 = vsub.f32 2.0, %v437
        %v440 = vmul.f32 %v434, %v438
        %v441 = vmul.f32 %v435, %v439
        %v444 = vcombine.low %v440, %v441
        %v446 = vmul.f32 %v258, %v444
        %447 = vst [vmem:[%s242] sm:$0xff] %v446
        %s448 = sand.u32 %s153, 1
        %s449 = scalar_lea.sflag [#allocation3], %s448
        %s450 = sand.u32 %s153, 1
        %s451 = smul.addr %s450, 8
        %s452 = scalar_lea.vmem [#allocation2], %s451
        // Predicated region
        $region41: #{tpu_custom_call.1} parent=39 // pred_check
          %p453 = pneg %p163
        $region42: #{tpu_custom_call.1} parent=39 // pred_check_branch
          %455 = sbr.rel (%p453) target = $region44
        $region43: #{tpu_custom_call.1} parent=39 // pred_region
          %s456 = smul.u32 2, %s24
          %s458 = ssub.s32 128, 128
          %459 = vsyncadd %s449, %s458
          %s460 = smul.addr %s23, 2
          %s461 = sadd.s32 %s456, %s460
          %s462 = smul.addr %s461, 64
          %s463 = scalar_lea.hbm %s5, %s462
          %s465 = sshll.u32 %s452, 4
          %s466 = int_to_ptr.vmem [resolvable:$true] %s465
          %468 = dma.vmem_to_hbm [thread:$0]  %s466, 128, %s463, %s449
        $region44: #{tpu_custom_call.1} parent=39 // pred_fallthru
          _
      $region40: #{tpu_custom_call.1} parent=5 // pred_fallthru
        _
      %p469 = scmp.le.s32.totalorder 2, %s14
      // Predicated region
      $region45: #{tpu_custom_call.1} parent=5 // pred_check
        %p470 = pneg %p469
      $region46: #{tpu_custom_call.1} parent=5 // pred_check_branch
        %472 = sbr.rel (%p470) target = $region48
      $region47: #{tpu_custom_call.1} parent=5 // pred_region
        %s473 = ssub.s32 %s14, 2
        // Predicated region
        $region49: #{tpu_custom_call.1} parent=47 // pred_check
          %p474 = pneg %p169
        $region50: #{tpu_custom_call.1} parent=47 // pred_check_branch
          %476 = sbr.rel (%p474) target = $region52
        $region51: #{tpu_custom_call.1} parent=47 // pred_region
          %s477 = sand.u32 %s154, 1
          %s478 = scalar_lea.sflag [#allocation3], %s477
          %s479 = sand.u32 %s154, 1
          %s480 = smul.addr %s479, 8
          %s481 = scalar_lea.vmem [#allocation2], %s480
          %482 = dma.done %s478, 128
        $region52: #{tpu_custom_call.1} parent=47 // pred_fallthru
          _
      $region48: #{tpu_custom_call.1} parent=5 // pred_fallthru
        _
    $region6: #{tpu_custom_call.1} parent=1 // loop_footer
      %s18 = sadd.s32 1, %s14
    $region7: #{tpu_custom_call.1} parent=1 // loop_footer_branch
      %13 = sbr.rel target = $region3
    $region8: #{tpu_custom_call.1} parent=1 // loop_exit
      _
    %483 = vsyncpa [#allocation3], 1
    %s484 = scalar_lea.sflag [#allocation3], 1
    %485 = vsyncpa %s484, 1

</llo_original>
